<compile_context>
chip_gen: v7x
topology: tpu7x:2x2x1
jax: 0.10.0
libtpu: 0.0.40
codegen_flags: <defaults>
</compile_context>

<pallas_src>
import functools

import jax
import jax.numpy as jnp
from jax.experimental import pallas as pl
from jax.experimental.pallas import tpu as pltpu


def _round_up(n, m):
    return ((n + m - 1) // m) * m


def _cdiv(a, b):
    return -(-a // b)


# --------------------------------------------------------------------------
# Kernel: two MXU matmuls + two VPU ReLUs, hidden activation never leaves VMEM.
# --------------------------------------------------------------------------
def adapter_kernel(x_ref, w1t_ref, w2t_ref, o_ref, *, compute_dtype):
    # x:(tb, c_in_p) native dtype, w1t:(c_in_p, hid_p), w2t:(hid_p, c_in_p)
    x = x_ref[...].astype(compute_dtype)                     # per-tile cast (VPU)
    h = jnp.dot(x, w1t_ref[...], preferred_element_type=jnp.float32)
    h = jnp.maximum(h, 0.0)                                  # ReLU (f32, VPU)
    y = jnp.dot(h.astype(compute_dtype), w2t_ref[...],
                preferred_element_type=jnp.float32)
    y = jnp.maximum(y, 0.0)                                  # ReLU (f32, VPU)
    o_ref[...] = y.astype(o_ref.dtype)


# --------------------------------------------------------------------------
# Generation-aware VMEM / core planning.
# --------------------------------------------------------------------------
def _tpu_vmem_plan():
    """Returns (tiling_budget_bytes, vmem_limit_bytes, tensorcores_per_chip)."""
    physical = 64 * 1024 * 1024          # v7x-safe default
    num_cores = 2                        # splitting is safe even on 1-TC parts
    try:
        info = pltpu.get_tpu_info()
        for name in ("vmem_capacity_bytes", "vmem_bytes", "vmem_size_bytes"):
            v = getattr(info, name, None)
            if v:
                physical = int(v)
                break
        for name in ("num_cores", "core_count", "num_tensorcores"):
            v = getattr(info, name, None)
            if v:
                num_cores = int(v)
                break
    except Exception:
        pass
    try:
        kind = jax.devices()[0].device_kind.lower()
        if "v5 lite" in kind or "v5e" in kind or "v6" in kind:
            num_cores = 1                              # single TensorCore/chip
            physical = max(physical, 128 * 1024 * 1024)
        elif "v5p" in kind or "v4" in kind:
            num_cores = 2
            physical = max(physical, 128 * 1024 * 1024)
    except Exception:
        pass
    budget = (3 * physical) // 8   # 24 MiB on 64 MiB parts, 48 MiB on 128 MiB
    limit = physical // 2          # 32 MiB on 64 MiB parts, 64 MiB on 128 MiB
    return budget, limit, num_cores


def _max_tile_rows(c_in_p, hidden_p, x_bytes, out_bytes, w_bytes, budget):
    """Largest batch tile (multiple of 8) fitting the VMEM budget."""
    weights = 2 * 2 * c_in_p * hidden_p * w_bytes       # w1t+w2t, double-buffered
    per_row = (2 * c_in_p * x_bytes                     # x tile (double-buffered)
               + 2 * c_in_p * out_bytes                 # out tile (double-buffered)
               + 4 * (c_in_p + hidden_p)                # f32 intermediates h, y
               + 2 * (c_in_p + hidden_p))               # compute-dtype casts
    avail = budget - weights
    if avail <= per_row * 8:
        # Resident weights (nearly) exhaust the budget: fall back to the
        # minimum tile and let vmem_limit_bytes absorb the rest.
        # TODO(synk): for very large c_in, stream/tile the weights with an
        # extra grid axis + f32 accumulator instead of holding them resident.
        return 8
    tile = min(1024, avail // per_row)
    return max(8, (int(tile) // 8) * 8)


def _plan_batch_tiling(B_p8, max_tile, num_cores):
    """Pick (tile_b, grid, padded_B). Even grid with >=4 steps on 2-TC chips;
    largest-fitting tile on 1-TC chips. Padding waste is < 8 rows per step."""
    max_tile = max(8, min((max_tile // 8) * 8, B_p8))
    tile = max_tile
    if num_cores >= 2 and B_p8 >= 32:
        # Aim for >= 4 grid steps so each TensorCore gets >= 2 (DMA pipelining
        # per core + balanced work).
        tile = min(tile, max(8, (B_p8 // 4 // 8) * 8))
    grid = _cdiv(B_p8, tile)
    if num_cores >= 2 and grid > 1 and grid % 2 == 1:
        grid += 1                                   # even split across the TCs
    tile = _round_up(_cdiv(B_p8, grid), 8)          # rebalance (never > max_tile)
    return tile, grid, grid * tile


# --------------------------------------------------------------------------
# Wrapper.
# --------------------------------------------------------------------------
def adapter_forward(x, w1, w2, *, compute_dtype=jnp.bfloat16, out_dtype=None,
                    tile_b=None):
    """relu(relu(x @ w1.T) @ w2.T) with a single fused Pallas kernel.

    x:  (..., c_in)
    w1: (hidden, c_in)  -- first Linear weight (PyTorch layout)
    w2: (c_in, hidden)  -- second Linear weight (PyTorch layout)
    """
    *lead, c_in = x.shape
    hidden = w1.shape[0]
    assert w1.shape == (hidden, c_in), w1.shape
    assert w2.shape == (c_in, hidden), w2.shape
    if out_dtype is None:
        out_dtype = x.dtype

    x2 = x.reshape(-1, c_in)
    B = x2.shape[0]

    # One-time transpose + cast of the (small) weights; x stays in its native
    # dtype (cast per tile inside the kernel).
    w1t = jnp.transpose(w1).astype(compute_dtype)            # (c_in, hidden)
    w2t = jnp.transpose(w2).astype(compute_dtype)            # (hidden, c_in)

    # Lane-dense padding: features to multiples of 128 (exact: ReLU(0) == 0,
    # zero pads contribute 0 to the matmuls and padded rows/cols are dropped).
    c_in_p = _round_up(c_in, 128)
    hidden_p = _round_up(hidden, 128)

    budget, vmem_limit, num_cores = _tpu_vmem_plan()
    x_bytes = jnp.dtype(x.dtype).itemsize
    out_bytes = jnp.dtype(out_dtype).itemsize
    w_bytes = jnp.dtype(compute_dtype).itemsize

    B_p8 = _round_up(max(B, 1), 8)
    if tile_b is None:
        max_tile = _max_tile_rows(c_in_p, hidden_p, x_bytes, out_bytes,
                                  w_bytes, budget)
        tile_b, grid_b, B_pad = _plan_batch_tiling(B_p8, max_tile, num_cores)
    else:
        tile_b = max(8, (int(tile_b) // 8) * 8)
        B_pad = _round_up(B_p8, tile_b)
        grid_b = B_pad // tile_b

    # Pad only when actually needed (no extra HBM pass for aligned shapes).
    xin = x2
    if (B_pad, c_in_p) != (B, c_in):
        xin = jnp.pad(x2, ((0, B_pad - B), (0, c_in_p - c_in)))
    if (c_in_p, hidden_p) != (c_in, hidden):
        w1t = jnp.pad(w1t, ((0, c_in_p - c_in), (0, hidden_p - hidden)))
        w2t = jnp.pad(w2t, ((0, hidden_p - hidden), (0, c_in_p - c_in)))

    kernel = functools.partial(adapter_kernel, compute_dtype=compute_dtype)
    out = pl.pallas_call(
        kernel,
        out_shape=jax.ShapeDtypeStruct((B_pad, c_in_p), out_dtype),
        grid_spec=pltpu.PrefetchScalarGridSpec(
            num_scalar_prefetch=0,
            grid=(grid_b,),
            in_specs=[
                pl.BlockSpec((tile_b, c_in_p), lambda i: (i, 0)),    # x (streamed)
                pl.BlockSpec((c_in_p, hidden_p), lambda i: (0, 0)),  # w1t (resident)
                pl.BlockSpec((hidden_p, c_in_p), lambda i: (0, 0)),  # w2t (resident)
            ],
            out_specs=pl.BlockSpec((tile_b, c_in_p), lambda i: (i, 0)),
        ),
        compiler_params=pltpu.CompilerParams(
            dimension_semantics=("parallel",),   # row sharding on 2-TC chips
            vmem_limit_bytes=vmem_limit,
        ),
    )(xin, w1t, w2t)

    if (B_pad, c_in_p) != (B, c_in):
        out = out[:B, :c_in]
    return out.reshape(*lead, c_in)


def adapter_reference(x, w1, w2):
    h = jnp.maximum(x @ w1.T, 0.0)
    return jnp.maximum(h @ w2.T, 0.0)


if __name__ == "__main__":
    # Small shapes consistent with the module: c_in=32, reduction=4 -> hidden=8.
    lead, c_in, reduction = (2, 8), 32, 4
    hidden = c_in // reduction

    key = jax.random.PRNGKey(0)
    kx, k1, k2 = jax.random.split(key, 3)
    x = jax.random.normal(kx, (*lead, c_in), dtype=jnp.float32)
    # nn.Linear-style uniform(-1/sqrt(fan_in), 1/sqrt(fan_in)) init.
    w1 = jax.random.uniform(k1, (hidden, c_in), jnp.float32,
                            -1.0 / jnp.sqrt(c_in), 1.0 / jnp.sqrt(c_in))
    w2 = jax.random.uniform(k2, (c_in, hidden), jnp.float32,
                            -1.0 / jnp.sqrt(hidden), 1.0 / jnp.sqrt(hidden))

    out = jax.block_until_ready(adapter_forward(x, w1, w2))

    ref = adapter_reference(x, w1, w2)
    assert out.shape == (*lead, c_in) and out.dtype == x.dtype
    # bf16 MXU feed with f32 accumulation -> loosened tolerance vs pure-f32 ref.
    assert jnp.allclose(out, ref, atol=2e-2, rtol=2e-2), "mismatch vs reference"
    print("KERNEL_OK")
</pallas_src>

<mosaic_0001>
module attributes {stable_mosaic.version = 11 : i64} {
  func.func @adapter_kernel(%arg0: i32, %arg1: memref<16x128xf32, #tpu.memory_space<vmem>>, %arg2: memref<128x128xbf16, #tpu.memory_space<vmem>>, %arg3: memref<128x128xbf16, #tpu.memory_space<vmem>>, %arg4: memref<16x128xf32, #tpu.memory_space<vmem>>) attributes {dimension_semantics = [#tpu.dimension_semantics<parallel>], iteration_bounds = array<i64: 1>, scalar_prefetch = 0 : i64, scratch_operands = 0 : i64, tpu.core_type = #tpu.core_type<tc>, window_params = [{transform_indices = @transform_0, window_bounds = array<i64: 16, 128>}, {pipeline_mode = #tpu.pipeline_mode<synchronous>, transform_indices = @transform_1, window_bounds = array<i64: 128, 128>}, {pipeline_mode = #tpu.pipeline_mode<synchronous>, transform_indices = @transform_2, window_bounds = array<i64: 128, 128>}, {transform_indices = @transform_3, window_bounds = array<i64: 16, 128>}]} {
    %c0 = arith.constant 0 : index
    %c0_0 = arith.constant 0 : index
    %0 = vector.load %arg1[%c0, %c0_0] : memref<16x128xf32, #tpu.memory_space<vmem>>, vector<16x128xf32>
    %1 = arith.truncf %0 : vector<16x128xf32> to vector<16x128xbf16>
    %c0_1 = arith.constant 0 : index
    %c0_2 = arith.constant 0 : index
    %2 = vector.load %arg2[%c0_1, %c0_2] : memref<128x128xbf16, #tpu.memory_space<vmem>>, vector<128x128xbf16>
    %cst = arith.constant dense<0.000000e+00> : vector<16x128xf32>
    %3 = tpu.matmul %1, %2, %cst {dimension_numbers = #tpu.dot_dimension_numbers<[1], [0], [0], [1], [0, 0, 1, 1], [], []>} : vector<16x128xbf16>, vector<128x128xbf16>, vector<16x128xf32> -> vector<16x128xf32>
    %cst_3 = arith.constant 0.000000e+00 : f32
    %4 = vector.broadcast %cst_3 : f32 to vector<16x128xf32>
    %5 = arith.maximumf %3, %4 : vector<16x128xf32>
    %6 = arith.truncf %5 : vector<16x128xf32> to vector<16x128xbf16>
    %c0_4 = arith.constant 0 : index
    %c0_5 = arith.constant 0 : index
    %7 = vector.load %arg3[%c0_4, %c0_5] : memref<128x128xbf16, #tpu.memory_space<vmem>>, vector<128x128xbf16>
    %cst_6 = arith.constant dense<0.000000e+00> : vector<16x128xf32>
    %8 = tpu.matmul %6, %7, %cst_6 {dimension_numbers = #tpu.dot_dimension_numbers<[1], [0], [0], [1], [0, 0, 1, 1], [], []>} : vector<16x128xbf16>, vector<128x128xbf16>, vector<16x128xf32> -> vector<16x128xf32>
    %cst_7 = arith.constant 0.000000e+00 : f32
    %9 = vector.broadcast %cst_7 : f32 to vector<16x128xf32>
    %10 = arith.maximumf %8, %9 : vector<16x128xf32>
    %c0_8 = arith.constant 0 : index
    %c0_9 = arith.constant 0 : index
    %11 = vector.load %arg4[%c0_8, %c0_9] : memref<16x128xf32, #tpu.memory_space<vmem>>, vector<16x128xf32>
    tpu.vector_store %arg4[%c0_8, %c0_9], %10 {strides = array<i32>} : memref<16x128xf32, #tpu.memory_space<vmem>>, vector<16x128xf32>,
    return
  }
  func.func @transform_0(%arg0: i32) -> (i32, i32) {
    %c0_i32 = arith.constant 0 : i32
    %c0_i32_0 = arith.constant 0 : i32
    return %arg0, %c0_i32 : i32, i32
  }
  func.func @transform_1(%arg0: i32) -> (i32, i32) {
    %c0_i32 = arith.constant 0 : i32
    %c0_i32_0 = arith.constant 0 : i32
    %c0_i32_1 = arith.constant 0 : i32
    return %c0_i32, %c0_i32_0 : i32, i32
  }
  func.func @transform_2(%arg0: i32) -> (i32, i32) {
    %c0_i32 = arith.constant 0 : i32
    %c0_i32_0 = arith.constant 0 : i32
    %c0_i32_1 = arith.constant 0 : i32
    return %c0_i32, %c0_i32_0 : i32, i32
  }
  func.func @transform_3(%arg0: i32) -> (i32, i32) {
    %c0_i32 = arith.constant 0 : i32
    %c0_i32_0 = arith.constant 0 : i32
    return %arg0, %c0_i32 : i32, i32
  }
}

</mosaic_0001>

<llo_original>
// kernel: tpu_custom_call.1
$region0: #{tpu_custom_call.1}
  #allocation0 [shape = 'u32[]', space=smem, size = 0x4, offset = 0x4, fixed_abs, tag = 'smem constant byte address 0x4 - core index']
  #allocation1 [shape = 'u32[144,128]{1,0:T(1,128)}', space=vmem, size = 0x12000, scoped, tag = 'internal scratch']
  %s0 = inlined_call_operand.hbm [shape: f32[16,128], index: 0, kind: input, shape index: {}]
  %s1 = inlined_call_operand.hbm [shape: bf16[128,128], index: 1, kind: input, shape index: {}]
  %s2 = inlined_call_operand.hbm [shape: bf16[128,128], index: 2, kind: input, shape index: {}]
  %s3 = inlined_call_operand.hbm [shape: f32[16,128], index: 3, kind: output, shape index: {}]
  %s4 = sld [smem:[#allocation0]]
  $region34: #{tpu_custom_call.1} parent=0
    _
  %s6 = ssub.s32 1, %s4
  %s7 = scalar_select 0, %s6, %s4
  $region1: #{tpu_custom_call.1} parent=0
    #allocation2 [shape = 'u8[8192]{0}', space=vmem, size = 0x2000, scoped, tag = 'input window, operand 0, single buffered']
    #allocation3 [shape = 's32[1]{0}', space=sflag, size = 0x4, scoped, tag = 'scoped memory for tpu_custom_call.1']
    #allocation4 [shape = 's32[1]{0}', space=sflag, size = 0x4, scoped, tag = 'scoped memory for tpu_custom_call.1']
    #allocation5 [shape = 'u8[32768]{0}', space=vmem, size = 0x8000, scoped, tag = 'input window, operand 1, single buffered']
    #allocation6 [shape = 's32[1]{0}', space=sflag, size = 0x4, scoped, tag = 'scoped memory for tpu_custom_call.1']
    #allocation7 [shape = 'u8[32768]{0}', space=vmem, size = 0x8000, scoped, tag = 'input window, operand 2, single buffered']
    #allocation8 [shape = 'u8[8192]{0}', space=vmem, size = 0x2000, scoped, tag = 'output window, operand 0, single buffered']
    %8 = vsyncpa [#allocation3], 0
    %9 = vsyncpa [#allocation6], 0
    %10 = vsyncpa [#allocation4], 0
    // Predicated region
    $region2: #{tpu_custom_call.1} parent=1 // pred_check
      _
    $region3: #{tpu_custom_call.1} parent=1 // pred_check_branch
      %12 = sbr.rel (0) target = $region5
    $region4: #{tpu_custom_call.1} parent=1 // pred_region
      %s14 = ssub.s32 256, 256
      %15 = vsyncadd [#allocation3], %s14
      %s16 = sshll.u32 [#allocation2], 4
      %s17 = int_to_ptr.vmem [resolvable:$true] %s16
      %22 = dma.hbm_to_vmem [thread:$0]  %s0, 256, %s17, [#allocation3], 128, 128, 8
    $region5: #{tpu_custom_call.1} parent=1 // pred_fallthru
      _
    // Predicated region
    $region6: #{tpu_custom_call.1} parent=1 // pred_check
      _
    $region7: #{tpu_custom_call.1} parent=1 // pred_check_branch
      %24 = sbr.rel (0) target = $region9
    $region8: #{tpu_custom_call.1} parent=1 // pred_region
      %s26 = ssub.s32 1024, 1024
      %27 = vsyncadd [#allocation6], %s26
      %s28 = sshll.u32 [#allocation5], 4
      %s29 = int_to_ptr.vmem [resolvable:$true] %s28
      %34 = dma.hbm_to_vmem [thread:$0]  %s1, 1024, %s29, [#allocation6], 64, 64, 4
    $region9: #{tpu_custom_call.1} parent=1 // pred_fallthru
      _
    // Predicated region
    $region10: #{tpu_custom_call.1} parent=1 // pred_check
      _
    $region11: #{tpu_custom_call.1} parent=1 // pred_check_branch
      %36 = sbr.rel (0) target = $region13
    $region12: #{tpu_custom_call.1} parent=1 // pred_region
      %s38 = ssub.s32 1024, 1024
      %39 = vsyncadd [#allocation6], %s38
      %s40 = sshll.u32 [#allocation7], 4
      %s41 = int_to_ptr.vmem [resolvable:$true] %s40
      %46 = dma.hbm_to_vmem [thread:$0]  %s2, 1024, %s41, [#allocation6], 64, 64, 4
    $region13: #{tpu_custom_call.1} parent=1 // pred_fallthru
      _
    // Predicated region
    $region14: #{tpu_custom_call.1} parent=1 // pred_check
      _
    $region15: #{tpu_custom_call.1} parent=1 // pred_check_branch
      %48 = sbr.rel (0) target = $region17
    $region16: #{tpu_custom_call.1} parent=1 // pred_region
      %49 = dma.done [#allocation3], 256
    $region17: #{tpu_custom_call.1} parent=1 // pred_fallthru
      _
    // Predicated region
    $region18: #{tpu_custom_call.1} parent=1 // pred_check
      _
    $region19: #{tpu_custom_call.1} parent=1 // pred_check_branch
      %51 = sbr.rel (0) target = $region21
    $region20: #{tpu_custom_call.1} parent=1 // pred_region
      %52 = dma.done [#allocation6], 1024
    $region21: #{tpu_custom_call.1} parent=1 // pred_fallthru
      _
    // Predicated region
    $region22: #{tpu_custom_call.1} parent=1 // pred_check
      _
    $region23: #{tpu_custom_call.1} parent=1 // pred_check_branch
      %54 = sbr.rel (0) target = $region25
    $region24: #{tpu_custom_call.1} parent=1 // pred_region
      %55 = dma.done [#allocation6], 1024
    $region25: #{tpu_custom_call.1} parent=1 // pred_fallthru
      _
    %v57 = vld [vmem:[#allocation2] sm:$0xff]
    %v58 = vld [vmem:[#allocation2 + $0x8] sm:$0xff]
    %v59 = vpack.c.bf16 %v58, %v57
    %v60 = vld [vmem:[#allocation5] sm:$0xf]
    %v61 = vld [vmem:[#allocation5 + $0x4] sm:$0xf]
    %v62 = vld [vmem:[#allocation5 + $0x8] sm:$0xf]
    %v63 = vld [vmem:[#allocation5 + $0xc] sm:$0xf]
    %v64 = vld [vmem:[#allocation5 + $0x10] sm:$0xf]
    %v65 = vld [vmem:[#allocation5 + $0x14] sm:$0xf]
    %v66 = vld [vmem:[#allocation5 + $0x18] sm:$0xf]
    %v67 = vld [vmem:[#allocation5 + $0x1c] sm:$0xf]
    %v68 = vld [vmem:[#allocation5 + $0x20] sm:$0xf]
    %v69 = vld [vmem:[#allocation5 + $0x24] sm:$0xf]
    %v70 = vld [vmem:[#allocation5 + $0x28] sm:$0xf]
    %v71 = vld [vmem:[#allocation5 + $0x2c] sm:$0xf]
    %v72 = vld [vmem:[#allocation5 + $0x30] sm:$0xf]
    %v73 = vld [vmem:[#allocation5 + $0x34] sm:$0xf]
    %v74 = vld [vmem:[#allocation5 + $0x38] sm:$0xf]
    %v75 = vld [vmem:[#allocation5 + $0x3c] sm:$0xf]
    %v92 = vunpack.c.l.b16 %v60
    %v93 = vunpack.c.l.b16 %v61
    %v94 = vunpack.c.l.b16 %v62
    %v95 = vunpack.c.l.b16 %v63
    %v96 = vunpack.c.l.b16 %v64
    %v97 = vunpack.c.l.b16 %v65
    %v98 = vunpack.c.l.b16 %v66
    %v99 = vunpack.c.l.b16 %v67
    %v100 = vunpack.c.l.b16 %v68
    %v101 = vunpack.c.l.b16 %v69
    %v102 = vunpack.c.l.b16 %v70
    %v103 = vunpack.c.l.b16 %v71
    %v104 = vunpack.c.l.b16 %v72
    %v105 = vunpack.c.l.b16 %v73
    %v106 = vunpack.c.l.b16 %v74
    %v107 = vunpack.c.l.b16 %v75
    %v108 = vpack.c.b16 %v93, %v92
    %v109 = vpack.c.b16 %v95, %v94
    %v110 = vpack.c.b16 %v97, %v96
    %v111 = vpack.c.b16 %v99, %v98
    %v112 = vpack.c.b16 %v101, %v100
    %v113 = vpack.c.b16 %v103, %v102
    %v114 = vpack.c.b16 %v105, %v104
    %v115 = vpack.c.b16 %v107, %v106
    %124 = vmatprep.subr.bf16.mxu0 0
    %125 = vmatpush1.bf16.msra.mxu0 %v108
    %126 = vmatprep.subr.bf16.mxu0 0
    %127 = vmatpush1.bf16.msra.mxu0 %v109
    %128 = vmatprep.subr.bf16.mxu0 0
    %129 = vmatpush1.bf16.msra.mxu0 %v110
    %130 = vmatprep.subr.bf16.mxu0 0
    %131 = vmatpush1.bf16.msra.mxu0 %v111
    %132 = vmatprep.subr.bf16.mxu0 0
    %133 = vmatpush1.bf16.msra.mxu0 %v112
    %134 = vmatprep.subr.bf16.mxu0 0
    %135 = vmatpush1.bf16.msra.mxu0 %v113
    %136 = vmatprep.subr.bf16.mxu0 0
    %137 = vmatpush1.bf16.msra.mxu0 %v114
    %138 = vmatprep.subr.bf16.mxu0 0
    %139 = vmatpush1.bf16.msra.mxu0 %v115
    %140 = vmatprep.subr.bf16.mxu0 0
    %141 = vmatpush1.bf16.msra.mxu0 0
    %142 = vmatprep.subr.bf16.mxu0 0
    %143 = vmatpush1.bf16.msra.mxu0 0
    %144 = vmatprep.subr.bf16.mxu0 0
    %145 = vmatpush1.bf16.msra.mxu0 0
    %146 = vmatprep.subr.bf16.mxu0 0
    %147 = vmatpush1.bf16.msra.mxu0 0
    %148 = vmatprep.subr.bf16.mxu0 0
    %149 = vmatpush1.bf16.msra.mxu0 0
    %150 = vmatprep.subr.bf16.mxu0 0
    %151 = vmatpush1.bf16.msra.mxu0 0
    %152 = vmatprep.subr.bf16.mxu0 0
    %153 = vmatpush1.bf16.msra.mxu0 0
    %154 = vmatprep.subr.bf16.mxu0 0
    %155 = vmatpush1.bf16.msra.mxu0 0
    %156 = vmatprep.mubr.bf16.mxu0 0
    %157 = vmatmul.mubr.bf16.gmra.mrb[0].mxu0 %v59
    %v158 = vpop.f32.mrb[0].mxu0
    %v159 = vadd.f32 0.0, %v158
    %v160 = vpop.f32.mrb[0].mxu0
    %v161 = vpop.f32.mrb[0].mxu0
    %v162 = vadd.f32 0.0, %v161
    %v163 = vpop.f32.mrb[0].mxu0
    %164 = vdwg.mxu0
    %v165 = vmax.f32 %v159, 0.0
    %v166 = vmax.f32 %v162, 0.0
    %v167 = vpack.c.bf16 %v166, %v165
    %v168 = vld [vmem:[#allocation7] sm:$0xf]
    %v169 = vld [vmem:[#allocation7 + $0x4] sm:$0xf]
    %v170 = vld [vmem:[#allocation7 + $0x8] sm:$0xf]
    %v171 = vld [vmem:[#allocation7 + $0xc] sm:$0xf]
    %v172 = vld [vmem:[#allocation7 + $0x10] sm:$0xf]
    %v173 = vld [vmem:[#allocation7 + $0x14] sm:$0xf]
    %v174 = vld [vmem:[#allocation7 + $0x18] sm:$0xf]
    %v175 = vld [vmem:[#allocation7 + $0x1c] sm:$0xf]
    %v176 = vld [vmem:[#allocation7 + $0x20] sm:$0xf]
    %v177 = vld [vmem:[#allocation7 + $0x24] sm:$0xf]
    %v178 = vld [vmem:[#allocation7 + $0x28] sm:$0xf]
    %v179 = vld [vmem:[#allocation7 + $0x2c] sm:$0xf]
    %v180 = vld [vmem:[#allocation7 + $0x30] sm:$0xf]
    %v181 = vld [vmem:[#allocation7 + $0x34] sm:$0xf]
    %v182 = vld [vmem:[#allocation7 + $0x38] sm:$0xf]
    %v183 = vld [vmem:[#allocation7 + $0x3c] sm:$0xf]
    %v200 = vunpack.c.l.b16 %v168
    %v201 = vunpack.c.l.b16 %v169
    %v202 = vunpack.c.l.b16 %v170
    %v203 = vunpack.c.l.b16 %v171
    %v204 = vunpack.c.l.b16 %v172
    %v205 = vunpack.c.l.b16 %v173
    %v206 = vunpack.c.l.b16 %v174
    %v207 = vunpack.c.l.b16 %v175
    %v208 = vunpack.c.l.b16 %v176
    %v209 = vunpack.c.l.b16 %v177
    %v210 = vunpack.c.l.b16 %v178
    %v211 = vunpack.c.l.b16 %v179
    %v212 = vunpack.c.l.b16 %v180
    %v213 = vunpack.c.l.b16 %v181
    %v214 = vunpack.c.l.b16 %v182
    %v215 = vunpack.c.l.b16 %v183
    %v216 = vpack.c.b16 %v201, %v200
    %v217 = vpack.c.b16 %v203, %v202
    %v218 = vpack.c.b16 %v205, %v204
    %v219 = vpack.c.b16 %v207, %v206
    %v220 = vpack.c.b16 %v209, %v208
    %v221 = vpack.c.b16 %v211, %v210
    %v222 = vpack.c.b16 %v213, %v212
    %v223 = vpack.c.b16 %v215, %v214
    %232 = vmatprep.subr.bf16.mxu0 0
    %233 = vmatpush1.bf16.msra.mxu0 %v216
    %234 = vmatprep.subr.bf16.mxu0 0
    %235 = vmatpush1.bf16.msra.mxu0 %v217
    %236 = vmatprep.subr.bf16.mxu0 0
    %237 = vmatpush1.bf16.msra.mxu0 %v218
    %238 = vmatprep.subr.bf16.mxu0 0
    %239 = vmatpush1.bf16.msra.mxu0 %v219
    %240 = vmatprep.subr.bf16.mxu0 0
    %241 = vmatpush1.bf16.msra.mxu0 %v220
    %242 = vmatprep.subr.bf16.mxu0 0
    %243 = vmatpush1.bf16.msra.mxu0 %v221
    %244 = vmatprep.subr.bf16.mxu0 0
    %245 = vmatpush1.bf16.msra.mxu0 %v222
    %246 = vmatprep.subr.bf16.mxu0 0
    %247 = vmatpush1.bf16.msra.mxu0 %v223
    %248 = vmatprep.subr.bf16.mxu0 0
    %249 = vmatpush1.bf16.msra.mxu0 0
    %250 = vmatprep.subr.bf16.mxu0 0
    %251 = vmatpush1.bf16.msra.mxu0 0
    %252 = vmatprep.subr.bf16.mxu0 0
    %253 = vmatpush1.bf16.msra.mxu0 0
    %254 = vmatprep.subr.bf16.mxu0 0
    %255 = vmatpush1.bf16.msra.mxu0 0
    %256 = vmatprep.subr.bf16.mxu0 0
    %257 = vmatpush1.bf16.msra.mxu0 0
    %258 = vmatprep.subr.bf16.mxu0 0
    %259 = vmatpush1.bf16.msra.mxu0 0
    %260 = vmatprep.subr.bf16.mxu0 0
    %261 = vmatpush1.bf16.msra.mxu0 0
    %262 = vmatprep.subr.bf16.mxu0 0
    %263 = vmatpush1.bf16.msra.mxu0 0
    %264 = vmatprep.mubr.bf16.mxu0 0
    %265 = vmatmul.mubr.bf16.gmra.mrb[0].mxu0 %v167
    %v266 = vpop.f32.mrb[0].mxu0
    %v267 = vadd.f32 0.0, %v266
    %v268 = vpop.f32.mrb[0].mxu0
    %v269 = vpop.f32.mrb[0].mxu0
    %v270 = vadd.f32 0.0, %v269
    %v271 = vpop.f32.mrb[0].mxu0
    %272 = vdwg.mxu0
    %v273 = vmax.f32 %v267, 0.0
    %v274 = vmax.f32 %v270, 0.0
    %275 = vst [vmem:[#allocation8] sm:$0xff] %v273
    %276 = vst [vmem:[#allocation8 + $0x8] sm:$0xff] %v274
    // Predicated region
    $region26: #{tpu_custom_call.1} parent=1 // pred_check
      _
    $region27: #{tpu_custom_call.1} parent=1 // pred_check_branch
      %278 = sbr.rel (0) target = $region29
    $region28: #{tpu_custom_call.1} parent=1 // pred_region
      %s280 = ssub.s32 256, 256
      %281 = vsyncadd [#allocation4], %s280
      %s282 = sshll.u32 [#allocation8], 4
      %s283 = int_to_ptr.vmem [resolvable:$true] %s282
      %288 = dma.vmem_to_hbm [thread:$0]  %s283, 256, %s3, [#allocation4], 128, 128, 8
    $region29: #{tpu_custom_call.1} parent=1 // pred_fallthru
      _
    // Predicated region
    $region30: #{tpu_custom_call.1} parent=1 // pred_check
      _
    $region31: #{tpu_custom_call.1} parent=1 // pred_check_branch
      %290 = sbr.rel (0) target = $region33
    $region32: #{tpu_custom_call.1} parent=1 // pred_region
      %291 = dma.done [#allocation4], 256
    $region33: #{tpu_custom_call.1} parent=1 // pred_fallthru
      _
    %292 = vsyncpa [#allocation3], 1
    %293 = vsyncpa [#allocation6], 1
    %294 = vsyncpa [#allocation4], 1

</llo_original>
